<compile_context>
chip_gen: v6e
topology: v6e:2x2x1
jax: 0.10.0
libtpu: 0.0.40
codegen_flags: <defaults>
</compile_context>

<pallas_src>
import functools
import math

import jax
import jax.numpy as jnp
from jax.experimental import pallas as pl
from jax.experimental.pallas import tpu as pltpu


def _layer_norm(x, g, b, eps=1e-5):
    # torch.nn.LayerNorm: biased variance over the last dim, eps=1e-5
    mu = jnp.mean(x, axis=-1, keepdims=True)
    var = jnp.mean((x - mu) ** 2, axis=-1, keepdims=True)
    return (x - mu) * jax.lax.rsqrt(var + eps) * g + b


# ---------------------------------------------------------------------------
# Kernel 1: LN1 + fused Q/K/V projection.  Output layout is head-split
# (B, H, S, dh); the split is done with static lane slices (no in-kernel
# reshape/transpose, no wrapper-side HBM transpose pass).
# ---------------------------------------------------------------------------
def qkv_proj_kernel(x_ref, g1_ref, b1_ref, wqkv_ref, bqkv_ref,
                    q_ref, k_ref, v_ref):
    D = x_ref.shape[-1]
    H = q_ref.shape[1]
    dh = q_ref.shape[-1]

    xn = _layer_norm(x_ref[0], g1_ref[...], b1_ref[...])
    xn = xn.astype(wqkv_ref.dtype)                       # bf16 feed for the MXU
    qkv = (jnp.dot(xn, wqkv_ref[...], preferred_element_type=jnp.float32)
           + bqkv_ref[...])                              # (TS, 3D) f32

    for h in range(H):                                   # static unroll, H small
        q_ref[0, h] = qkv[:, h * dh:(h + 1) * dh].astype(q_ref.dtype)
        k_ref[0, h] = qkv[:, D + h * dh:D + (h + 1) * dh].astype(k_ref.dtype)
        v_ref[0, h] = qkv[:, 2 * D + h * dh:2 * D + (h + 1) * dh].astype(v_ref.dtype)


# ---------------------------------------------------------------------------
# Kernel 2: flash-style multi-head attention, all heads batched per step.
#   grid = (B, S//TQ, S//TK); the KV axis is "arbitrary", m/l/acc live in VMEM
#   scratch.  Epilogue fuses the Wo projection (per-head accumulated matmuls
#   against a (H, dh, D) view of Wo) + bias + residual -> lane-dense (TQ, D).
# ---------------------------------------------------------------------------
def attention_kernel(scale, q_ref, k_ref, v_ref, x_ref, wo_ref, bo_ref,
                     o_ref, m_sc, l_sc, acc_sc):
    ki = pl.program_id(2)
    H = q_ref.shape[1]

    @pl.when(ki == 0)
    def _():
        m_sc[...] = jnp.full(m_sc.shape, -jnp.inf, m_sc.dtype)
        l_sc[...] = jnp.zeros(l_sc.shape, l_sc.dtype)
        acc_sc[...] = jnp.zeros(acc_sc.shape, acc_sc.dtype)

    q = q_ref[0] * scale                                 # scale q, not the scores slab
    k = k_ref[0]                                         # (H, TK, dh) bf16
    v = v_ref[0]
    s = jnp.einsum("hqd,hkd->hqk", q, k,
                   preferred_element_type=jnp.float32)   # (H, TQ, TK) f32

    m_prev = m_sc[...]
    m_new = jnp.maximum(m_prev, jnp.max(s, axis=-1, keepdims=True))
    alpha = jnp.exp(m_prev - m_new)
    p = jnp.exp(s - m_new)
    l_sc[...] = alpha * l_sc[...] + jnp.sum(p, axis=-1, keepdims=True)
    acc_sc[...] = alpha * acc_sc[...] + jnp.einsum(
        "hqk,hkd->hqd", p.astype(v.dtype), v, preferred_element_type=jnp.float32)
    m_sc[...] = m_new

    @pl.when(ki == pl.num_programs(2) - 1)
    def _():
        ctx = acc_sc[...] * pl.reciprocal(l_sc[...], approx=True)   # (H, TQ, dh) f32
        TQ = o_ref.shape[1]
        D = o_ref.shape[2]
        # head merge + Wo fused: sum_h ctx[h] @ Wo[h]   (no transpose/concat)
        out = jnp.zeros((TQ, D), jnp.float32)
        for h in range(H):
            out = out + jnp.dot(ctx[h].astype(wo_ref.dtype), wo_ref[h],
                                preferred_element_type=jnp.float32)
        o_ref[0] = (x_ref[0] + out + bo_ref[...]).astype(o_ref.dtype)  # residual 1


# ---------------------------------------------------------------------------
# Kernel 3: LN2 + FFN (d_ff tiled, f32 accumulator) + residual.
#   grid = (rows//TR, d_ff//TF); the d_ff axis is "arbitrary".
# ---------------------------------------------------------------------------
def ffn_kernel(y_ref, g2_ref, b2_ref, w1_ref, bf1_ref, w2_ref, bf2_ref,
               o_ref, yn_sc, acc_sc):
    f = pl.program_id(1)

    @pl.when(f == 0)
    def _():
        yn_sc[...] = _layer_norm(y_ref[...], g2_ref[...],
                                 b2_ref[...]).astype(yn_sc.dtype)
        acc_sc[...] = jnp.zeros(acc_sc.shape, acc_sc.dtype)

    h1 = jnp.maximum(
        jnp.dot(yn_sc[...], w1_ref[...], preferred_element_type=jnp.float32)
        + bf1_ref[...], 0.0)
    acc_sc[...] += jnp.dot(h1.astype(w2_ref.dtype), w2_ref[...],
                           preferred_element_type=jnp.float32)

    @pl.when(f == pl.num_programs(1) - 1)
    def _():
        o_ref[...] = (y_ref[...] + acc_sc[...] + bf2_ref[...]).astype(o_ref.dtype)


def _tile(total, target, align):
    """Largest multiple-of-`align` divisor of `total` <= target, else `total`.

    Returning either a multiple of `align` (8 for sublane dims, 128 for lane
    dims) or the full dim keeps every BlockSpec within the (8,128) constraint.
    """
    t = min(total, target)
    t -= t % align
    while t >= align:
        if total % t == 0:
            return t
        t -= align
    return total


def transformer_encoder_layer(x, params, n_heads, *,
                              seq_tile=256, q_tile=128, kv_tile=128,
                              row_tile=512, ff_tile=2048):
    """Pre-LN transformer encoder layer.  x: (B, S, D) float32."""
    B, S, D = x.shape
    d_ff = params["w_ff1"].shape[1]
    assert D % n_heads == 0
    dh = D // n_heads
    rows = B * S

    TS = _tile(S, seq_tile, 8)
    TQ = _tile(S, q_tile, 8)
    TK = _tile(S, kv_tile, 8)
    TR = _tile(rows, row_tile, 8)
    TF = _tile(d_ff, ff_tile, 128)

    bf16 = jnp.bfloat16
    f32 = jnp.float32

    # Fused QKV weight / bias; per-head view of Wo (free row-major reshape).
    wqkv = jnp.concatenate(
        [params["wq"], params["wk"], params["wv"]], axis=1).astype(bf16)   # (D, 3D)
    bqkv = jnp.concatenate(
        [params["bq"], params["bk"], params["bv"]], axis=1)                # (1, 3D)
    wo_h = params["wo"].astype(bf16).reshape(n_heads, dh, D)               # (H, dh, D)
    w1 = params["w_ff1"].astype(bf16)
    w2 = params["w_ff2"].astype(bf16)

    # Above 16/32 MiB scoped defaults, 16 MiB headroom under v7x's 64 MiB VMEM.
    VMEM_LIMIT = 48 * 1024 * 1024

    def const(shape):
        # Grid-invariant operand: single-buffered (double-buffering a block
        # whose index never changes only doubles resident VMEM).
        return pl.BlockSpec(shape, lambda *_: (0,) * len(shape),
                            pipeline_mode=pl.Buffered(1))

    # ---- 1) LN1 + fused QKV projection, head-split output -------------------
    qkv_cost = pl.CostEstimate(
        flops=int(2 * rows * D * 3 * D),
        transcendentals=int(rows),
        bytes_accessed=int(rows * D * 4 + 3 * D * D * 2 + 3 * rows * D * 2))
    q, k, v = pl.pallas_call(
        qkv_proj_kernel,
        out_shape=tuple(jax.ShapeDtypeStruct((B, n_heads, S, dh), bf16)
                        for _ in range(3)),
        grid=(B, S // TS),
        in_specs=[
            pl.BlockSpec((1, TS, D), lambda b, si: (b, si, 0)),   # x tile
            const((1, D)), const((1, D)),                         # LN1 gamma, beta
            const((D, 3 * D)), const((1, 3 * D)),                 # fused Wqkv, bqkv
        ],
        out_specs=tuple(
            pl.BlockSpec((1, n_heads, TS, dh), lambda b, si: (b, 0, si, 0))
            for _ in range(3)),
        compiler_params=pltpu.CompilerParams(
            dimension_semantics=("parallel", "parallel"),
            vmem_limit_bytes=VMEM_LIMIT),
        cost_estimate=qkv_cost,
    )(x, params["ln1_g"], params["ln1_b"], wqkv, bqkv)

    # ---- 2) flash attention + fused Wo + residual ---------------------------
    attn_cost = pl.CostEstimate(
        flops=int(4 * B * n_heads * S * S * dh + 2 * rows * D * D),
        transcendentals=int(B * n_heads * S * S),
        bytes_accessed=int(3 * rows * D * 2 + 2 * rows * D * 4 + D * D * 2))
    y = pl.pallas_call(
        functools.partial(attention_kernel, 1.0 / math.sqrt(dh)),
        out_shape=jax.ShapeDtypeStruct((B, S, D), f32),
        grid=(B, S // TQ, S // TK),
        in_specs=[
            pl.BlockSpec((1, n_heads, TQ, dh), lambda b, qi, ki: (b, 0, qi, 0)),
            pl.BlockSpec((1, n_heads, TK, dh), lambda b, qi, ki: (b, 0, ki, 0)),
            pl.BlockSpec((1, n_heads, TK, dh), lambda b, qi, ki: (b, 0, ki, 0)),
            pl.BlockSpec((1, TQ, D), lambda b, qi, ki: (b, qi, 0)),   # residual x
            const((n_heads, dh, D)),                                  # Wo (per-head)
            const((1, D)),                                            # bo
        ],
        out_specs=pl.BlockSpec((1, TQ, D), lambda b, qi, ki: (b, qi, 0)),
        scratch_shapes=[
            pltpu.VMEM((n_heads, TQ, 1), f32),    # running max m
            pltpu.VMEM((n_heads, TQ, 1), f32),    # running denom l
            pltpu.VMEM((n_heads, TQ, dh), f32),   # running ctx accumulator
        ],
        compiler_params=pltpu.CompilerParams(
            dimension_semantics=("parallel", "parallel", "arbitrary"),
            vmem_limit_bytes=VMEM_LIMIT),
        cost_estimate=attn_cost,
    )(q, k, v, x, wo_h, params["bo"])

    # ---- 3) LN2 + FFN (d_ff tiled) + residual --------------------------------
    y_rows = y.reshape(rows, D)
    ffn_cost = pl.CostEstimate(
        flops=int(4 * rows * D * d_ff),
        transcendentals=int(rows),
        bytes_accessed=int(3 * rows * D * 4 + 2 * D * d_ff * 2))
    out = pl.pallas_call(
        ffn_kernel,
        out_shape=jax.ShapeDtypeStruct((rows, D), x.dtype),
        grid=(rows // TR, d_ff // TF),
        in_specs=[
            pl.BlockSpec((TR, D), lambda i, f: (i, 0)),     # y rows (resident over f)
            const((1, D)), const((1, D)),                   # LN2 gamma, beta
            pl.BlockSpec((D, TF), lambda i, f: (0, f)),     # W1 column chunk
            pl.BlockSpec((1, TF), lambda i, f: (0, f)),     # b1 chunk
            pl.BlockSpec((TF, D), lambda i, f: (f, 0)),     # W2 row chunk
            const((1, D)),                                  # b2
        ],
        out_specs=pl.BlockSpec((TR, D), lambda i, f: (i, 0)),
        scratch_shapes=[
            pltpu.VMEM((TR, D), bf16),    # cached LN2(y) MXU feed
            pltpu.VMEM((TR, D), f32),     # FFN output accumulator
        ],
        compiler_params=pltpu.CompilerParams(
            dimension_semantics=("parallel", "arbitrary"),
            vmem_limit_bytes=VMEM_LIMIT),
        cost_estimate=ffn_cost,
    )(y_rows, params["ln2_g"], params["ln2_b"],
      w1, params["b_ff1"], w2, params["b_ff2"])

    return out.reshape(B, S, D)


# ---------------------------------------------------------------------------
# Parameter init (weights pre-transposed to (in_features, out_features)).
# ---------------------------------------------------------------------------
def init_params(key, d_model, d_ff):
    ks = jax.random.split(key, 12)
    s = 0.02
    f32 = jnp.float32
    return {
        "wq": jax.random.normal(ks[0], (d_model, d_model), f32) * s,
        "wk": jax.random.normal(ks[1], (d_model, d_model), f32) * s,
        "wv": jax.random.normal(ks[2], (d_model, d_model), f32) * s,
        "wo": jax.random.normal(ks[3], (d_model, d_model), f32) * s,
        "bq": jax.random.normal(ks[6], (1, d_model), f32) * s,
        "bk": jax.random.normal(ks[7], (1, d_model), f32) * s,
        "bv": jax.random.normal(ks[8], (1, d_model), f32) * s,
        "bo": jax.random.normal(ks[9], (1, d_model), f32) * s,
        "w_ff1": jax.random.normal(ks[4], (d_model, d_ff), f32) * s,
        "b_ff1": jax.random.normal(ks[10], (1, d_ff), f32) * s,
        "w_ff2": jax.random.normal(ks[5], (d_ff, d_model), f32) * s,
        "b_ff2": jax.random.normal(ks[11], (1, d_model), f32) * s,
        # torch nn.LayerNorm default init: weight=1, bias=0
        "ln1_g": jnp.ones((1, d_model), f32),
        "ln1_b": jnp.zeros((1, d_model), f32),
        "ln2_g": jnp.ones((1, d_model), f32),
        "ln2_b": jnp.zeros((1, d_model), f32),
    }


def _reference(x, params, n_heads):
    """Pure-JAX f32 reference of the same pre-LN block (for a sanity check)."""
    B, S, D = x.shape
    dh = D // n_heads

    def ln(t, g, b):
        mu = jnp.mean(t, -1, keepdims=True)
        var = jnp.mean((t - mu) ** 2, -1, keepdims=True)
        return (t - mu) * jax.lax.rsqrt(var + 1e-5) * g + b

    xn = ln(x, params["ln1_g"], params["ln1_b"])
    q = xn @ params["wq"] + params["bq"]
    k = xn @ params["wk"] + params["bk"]
    v = xn @ params["wv"] + params["bv"]

    def heads(t):
        return t.reshape(B, S, n_heads, dh).transpose(0, 2, 1, 3)

    qh, kh, vh = heads(q), heads(k), heads(v)
    scores = jnp.einsum("bhqd,bhkd->bhqk", qh, kh) / math.sqrt(dh)
    attn = jax.nn.softmax(scores, axis=-1)
    ctx = jnp.einsum("bhqk,bhkd->bhqd", attn, vh)
    ctx = ctx.transpose(0, 2, 1, 3).reshape(B, S, D)
    y = x + (ctx @ params["wo"] + params["bo"])

    yn = ln(y, params["ln2_g"], params["ln2_b"])
    h1 = jnp.maximum(yn @ params["w_ff1"] + params["b_ff1"], 0.0)
    return y + (h1 @ params["w_ff2"] + params["b_ff2"])


if __name__ == "__main__":
    B, S, D, H, D_FF = 2, 8, 32, 4, 64   # d_model=32, n_heads=4, d_ff=64, dropout=0.0
    key = jax.random.PRNGKey(0)
    kx, kp = jax.random.split(key)
    x = jax.random.normal(kx, (B, S, D), jnp.float32)
    params = init_params(kp, D, D_FF)

    out = transformer_encoder_layer(x, params, n_heads=H)
    out = jax.block_until_ready(out)
    assert out.shape == (B, S, D) and out.dtype == jnp.float32

    ref = _reference(x, params, H)
    max_err = float(jnp.max(jnp.abs(out - ref)))
    assert max_err < 5e-2, f"mismatch vs reference: max abs err = {max_err}"

    print("KERNEL_OK")
</pallas_src>

<mosaic_0001>
module attributes {stable_mosaic.version = 11 : i64} {
  func.func @qkv_proj_kernel(%arg0: i32, %arg1: i32, %arg2: memref<1x8x32xf32, #tpu.memory_space<vmem>>, %arg3: memref<1x32xf32, #tpu.memory_space<vmem>>, %arg4: memref<1x32xf32, #tpu.memory_space<vmem>>, %arg5: memref<32x96xbf16, #tpu.memory_space<vmem>>, %arg6: memref<1x96xf32, #tpu.memory_space<vmem>>, %arg7: memref<1x4x8x8xbf16, #tpu.memory_space<vmem>>, %arg8: memref<1x4x8x8xbf16, #tpu.memory_space<vmem>>, %arg9: memref<1x4x8x8xbf16, #tpu.memory_space<vmem>>) attributes {dimension_semantics = [#tpu.dimension_semantics<parallel>, #tpu.dimension_semantics<parallel>], iteration_bounds = array<i64: 2, 1>, scalar_prefetch = 0 : i64, scratch_operands = 0 : i64, tpu.core_type = #tpu.core_type<tc>, window_params = [{transform_indices = @transform_0, window_bounds = array<i64: 1, 8, 32>}, {pipeline_mode = #tpu.pipeline_mode<synchronous>, transform_indices = @transform_1, window_bounds = array<i64: 1, 32>}, {pipeline_mode = #tpu.pipeline_mode<synchronous>, transform_indices = @transform_2, window_bounds = array<i64: 1, 32>}, {pipeline_mode = #tpu.pipeline_mode<synchronous>, transform_indices = @transform_3, window_bounds = array<i64: 32, 96>}, {pipeline_mode = #tpu.pipeline_mode<synchronous>, transform_indices = @transform_4, window_bounds = array<i64: 1, 96>}, {transform_indices = @transform_5, window_bounds = array<i64: 1, 4, 8, 8>}, {transform_indices = @transform_6, window_bounds = array<i64: 1, 4, 8, 8>}, {transform_indices = @transform_7, window_bounds = array<i64: 1, 4, 8, 8>}]} {
    %c0 = arith.constant 0 : index
    %c0_0 = arith.constant 0 : index
    %c0_1 = arith.constant 0 : index
    %0 = vector.load %arg2[%c0, %c0_0, %c0_1] : memref<1x8x32xf32, #tpu.memory_space<vmem>>, vector<1x8x32xf32>
    %1 = vector.shape_cast %0 : vector<1x8x32xf32> to vector<8x32xf32>
    %c0_2 = arith.constant 0 : index
    %c0_3 = arith.constant 0 : index
    %2 = vector.load %arg3[%c0_2, %c0_3] : memref<1x32xf32, #tpu.memory_space<vmem>>, vector<1x32xf32>
    %c0_4 = arith.constant 0 : index
    %c0_5 = arith.constant 0 : index
    %3 = vector.load %arg4[%c0_4, %c0_5] : memref<1x32xf32, #tpu.memory_space<vmem>>, vector<1x32xf32>
    %cst = arith.constant dense<0.000000e+00> : vector<8xf32>
    %4 = vector.multi_reduction <add>, %1, %cst [1] : vector<8x32xf32> to vector<8xf32>
    %5 = vector.shape_cast %4 : vector<8xf32> to vector<8x1xf32>
    %cst_6 = arith.constant 3.200000e+01 : f32
    %6 = vector.broadcast %cst_6 : f32 to vector<8x1xf32>
    %7 = arith.divf %5, %6 : vector<8x1xf32>
    %8 = vector.broadcast %7 : vector<8x1xf32> to vector<8x32xf32>
    %9 = arith.subf %1, %8 : vector<8x32xf32>
    %10 = arith.mulf %9, %9 : vector<8x32xf32>
    %cst_7 = arith.constant dense<0.000000e+00> : vector<8xf32>
    %11 = vector.multi_reduction <add>, %10, %cst_7 [1] : vector<8x32xf32> to vector<8xf32>
    %12 = vector.shape_cast %11 : vector<8xf32> to vector<8x1xf32>
    %cst_8 = arith.constant 3.200000e+01 : f32
    %13 = vector.broadcast %cst_8 : f32 to vector<8x1xf32>
    %14 = arith.divf %12, %13 : vector<8x1xf32>
    %15 = vector.broadcast %7 : vector<8x1xf32> to vector<8x32xf32>
    %16 = arith.subf %1, %15 : vector<8x32xf32>
    %cst_9 = arith.constant 9.99999974E-6 : f32
    %17 = vector.broadcast %cst_9 : f32 to vector<8x1xf32>
    %18 = arith.addf %14, %17 : vector<8x1xf32>
    %19 = math.rsqrt %18 : vector<8x1xf32>
    %20 = vector.broadcast %19 : vector<8x1xf32> to vector<8x32xf32>
    %21 = arith.mulf %16, %20 : vector<8x32xf32>
    %22 = vector.broadcast %2 : vector<1x32xf32> to vector<8x32xf32>
    %23 = arith.mulf %21, %22 : vector<8x32xf32>
    %24 = vector.broadcast %3 : vector<1x32xf32> to vector<8x32xf32>
    %25 = arith.addf %23, %24 : vector<8x32xf32>
    %26 = arith.truncf %25 : vector<8x32xf32> to vector<8x32xbf16>
    %c0_10 = arith.constant 0 : index
    %c0_11 = arith.constant 0 : index
    %27 = vector.load %arg5[%c0_10, %c0_11] : memref<32x96xbf16, #tpu.memory_space<vmem>>, vector<32x96xbf16>
    %cst_12 = arith.constant dense<0.000000e+00> : vector<8x96xf32>
    %28 = tpu.matmul %26, %27, %cst_12 {dimension_numbers = #tpu.dot_dimension_numbers<[1], [0], [0], [1], [0, 0, 1, 1], [], []>} : vector<8x32xbf16>, vector<32x96xbf16>, vector<8x96xf32> -> vector<8x96xf32>
    %c0_13 = arith.constant 0 : index
    %c0_14 = arith.constant 0 : index
    %29 = vector.load %arg6[%c0_13, %c0_14] : memref<1x96xf32, #tpu.memory_space<vmem>>, vector<1x96xf32>
    %30 = vector.broadcast %29 : vector<1x96xf32> to vector<8x96xf32>
    %31 = arith.addf %28, %30 : vector<8x96xf32>
    %32 = vector.extract_strided_slice %31 {offsets = [0, 0], sizes = [8, 8], strides = [1, 1]} : vector<8x96xf32> to vector<8x8xf32>
    %33 = arith.truncf %32 : vector<8x8xf32> to vector<8x8xbf16>
    %c0_15 = arith.constant 0 : index
    %c0_16 = arith.constant 0 : index
    %c0_17 = arith.constant 0 : index
    %c0_18 = arith.constant 0 : index
    %34 = vector.load %arg7[%c0_15, %c0_16, %c0_17, %c0_18] : memref<1x4x8x8xbf16, #tpu.memory_space<vmem>>, vector<1x1x8x8xbf16>
    %35 = vector.shape_cast %34 : vector<1x1x8x8xbf16> to vector<8x8xbf16>
    %36 = vector.shape_cast %33 : vector<8x8xbf16> to vector<1x1x8x8xbf16>
    tpu.vector_store %arg7[%c0_15, %c0_16, %c0_17, %c0_18], %36 {strides = array<i32>} : memref<1x4x8x8xbf16, #tpu.memory_space<vmem>>, vector<1x1x8x8xbf16>,
    %37 = vector.extract_strided_slice %31 {offsets = [0, 32], sizes = [8, 8], strides = [1, 1]} : vector<8x96xf32> to vector<8x8xf32>
    %38 = arith.truncf %37 : vector<8x8xf32> to vector<8x8xbf16>
    %c0_19 = arith.constant 0 : index
    %c0_20 = arith.constant 0 : index
    %c0_21 = arith.constant 0 : index
    %c0_22 = arith.constant 0 : index
    %39 = vector.load %arg8[%c0_19, %c0_20, %c0_21, %c0_22] : memref<1x4x8x8xbf16, #tpu.memory_space<vmem>>, vector<1x1x8x8xbf16>
    %40 = vector.shape_cast %39 : vector<1x1x8x8xbf16> to vector<8x8xbf16>
    %41 = vector.shape_cast %38 : vector<8x8xbf16> to vector<1x1x8x8xbf16>
    tpu.vector_store %arg8[%c0_19, %c0_20, %c0_21, %c0_22], %41 {strides = array<i32>} : memref<1x4x8x8xbf16, #tpu.memory_space<vmem>>, vector<1x1x8x8xbf16>,
    %42 = vector.extract_strided_slice %31 {offsets = [0, 64], sizes = [8, 8], strides = [1, 1]} : vector<8x96xf32> to vector<8x8xf32>
    %43 = arith.truncf %42 : vector<8x8xf32> to vector<8x8xbf16>
    %c0_23 = arith.constant 0 : index
    %c0_24 = arith.constant 0 : index
    %c0_25 = arith.constant 0 : index
    %c0_26 = arith.constant 0 : index
    %44 = vector.load %arg9[%c0_23, %c0_24, %c0_25, %c0_26] : memref<1x4x8x8xbf16, #tpu.memory_space<vmem>>, vector<1x1x8x8xbf16>
    %45 = vector.shape_cast %44 : vector<1x1x8x8xbf16> to vector<8x8xbf16>
    %46 = vector.shape_cast %43 : vector<8x8xbf16> to vector<1x1x8x8xbf16>
    tpu.vector_store %arg9[%c0_23, %c0_24, %c0_25, %c0_26], %46 {strides = array<i32>} : memref<1x4x8x8xbf16, #tpu.memory_space<vmem>>, vector<1x1x8x8xbf16>,
    %47 = vector.extract_strided_slice %31 {offsets = [0, 8], sizes = [8, 8], strides = [1, 1]} : vector<8x96xf32> to vector<8x8xf32>
    %48 = arith.truncf %47 : vector<8x8xf32> to vector<8x8xbf16>
    %c0_27 = arith.constant 0 : index
    %c1 = arith.constant 1 : index
    %c0_28 = arith.constant 0 : index
    %c0_29 = arith.constant 0 : index
    %49 = vector.load %arg7[%c0_27, %c1, %c0_28, %c0_29] : memref<1x4x8x8xbf16, #tpu.memory_space<vmem>>, vector<1x1x8x8xbf16>
    %50 = vector.shape_cast %49 : vector<1x1x8x8xbf16> to vector<8x8xbf16>
    %51 = vector.shape_cast %48 : vector<8x8xbf16> to vector<1x1x8x8xbf16>
    tpu.vector_store %arg7[%c0_27, %c1, %c0_28, %c0_29], %51 {strides = array<i32>} : memref<1x4x8x8xbf16, #tpu.memory_space<vmem>>, vector<1x1x8x8xbf16>,
    %52 = vector.extract_strided_slice %31 {offsets = [0, 40], sizes = [8, 8], strides = [1, 1]} : vector<8x96xf32> to vector<8x8xf32>
    %53 = arith.truncf %52 : vector<8x8xf32> to vector<8x8xbf16>
    %c0_30 = arith.constant 0 : index
    %c1_31 = arith.constant 1 : index
    %c0_32 = arith.constant 0 : index
    %c0_33 = arith.constant 0 : index
    %54 = vector.load %arg8[%c0_30, %c1_31, %c0_32, %c0_33] : memref<1x4x8x8xbf16, #tpu.memory_space<vmem>>, vector<1x1x8x8xbf16>
    %55 = vector.shape_cast %54 : vector<1x1x8x8xbf16> to vector<8x8xbf16>
    %56 = vector.shape_cast %53 : vector<8x8xbf16> to vector<1x1x8x8xbf16>
    tpu.vector_store %arg8[%c0_30, %c1_31, %c0_32, %c0_33], %56 {strides = array<i32>} : memref<1x4x8x8xbf16, #tpu.memory_space<vmem>>, vector<1x1x8x8xbf16>,
    %57 = vector.extract_strided_slice %31 {offsets = [0, 72], sizes = [8, 8], strides = [1, 1]} : vector<8x96xf32> to vector<8x8xf32>
    %58 = arith.truncf %57 : vector<8x8xf32> to vector<8x8xbf16>
    %c0_34 = arith.constant 0 : index
    %c1_35 = arith.constant 1 : index
    %c0_36 = arith.constant 0 : index
    %c0_37 = arith.constant 0 : index
    %59 = vector.load %arg9[%c0_34, %c1_35, %c0_36, %c0_37] : memref<1x4x8x8xbf16, #tpu.memory_space<vmem>>, vector<1x1x8x8xbf16>
    %60 = vector.shape_cast %59 : vector<1x1x8x8xbf16> to vector<8x8xbf16>
    %61 = vector.shape_cast %58 : vector<8x8xbf16> to vector<1x1x8x8xbf16>
    tpu.vector_store %arg9[%c0_34, %c1_35, %c0_36, %c0_37], %61 {strides = array<i32>} : memref<1x4x8x8xbf16, #tpu.memory_space<vmem>>, vector<1x1x8x8xbf16>,
    %62 = vector.extract_strided_slice %31 {offsets = [0, 16], sizes = [8, 8], strides = [1, 1]} : vector<8x96xf32> to vector<8x8xf32>
    %63 = arith.truncf %62 : vector<8x8xf32> to vector<8x8xbf16>
    %c0_38 = arith.constant 0 : index
    %c2 = arith.constant 2 : index
    %c0_39 = arith.constant 0 : index
    %c0_40 = arith.constant 0 : index
    %64 = vector.load %arg7[%c0_38, %c2, %c0_39, %c0_40] : memref<1x4x8x8xbf16, #tpu.memory_space<vmem>>, vector<1x1x8x8xbf16>
    %65 = vector.shape_cast %64 : vector<1x1x8x8xbf16> to vector<8x8xbf16>
    %66 = vector.shape_cast %63 : vector<8x8xbf16> to vector<1x1x8x8xbf16>
    tpu.vector_store %arg7[%c0_38, %c2, %c0_39, %c0_40], %66 {strides = array<i32>} : memref<1x4x8x8xbf16, #tpu.memory_space<vmem>>, vector<1x1x8x8xbf16>,
    %67 = vector.extract_strided_slice %31 {offsets = [0, 48], sizes = [8, 8], strides = [1, 1]} : vector<8x96xf32> to vector<8x8xf32>
    %68 = arith.truncf %67 : vector<8x8xf32> to vector<8x8xbf16>
    %c0_41 = arith.constant 0 : index
    %c2_42 = arith.constant 2 : index
    %c0_43 = arith.constant 0 : index
    %c0_44 = arith.constant 0 : index
    %69 = vector.load %arg8[%c0_41, %c2_42, %c0_43, %c0_44] : memref<1x4x8x8xbf16, #tpu.memory_space<vmem>>, vector<1x1x8x8xbf16>
    %70 = vector.shape_cast %69 : vector<1x1x8x8xbf16> to vector<8x8xbf16>
    %71 = vector.shape_cast %68 : vector<8x8xbf16> to vector<1x1x8x8xbf16>
    tpu.vector_store %arg8[%c0_41, %c2_42, %c0_43, %c0_44], %71 {strides = array<i32>} : memref<1x4x8x8xbf16, #tpu.memory_space<vmem>>, vector<1x1x8x8xbf16>,
    %72 = vector.extract_strided_slice %31 {offsets = [0, 80], sizes = [8, 8], strides = [1, 1]} : vector<8x96xf32> to vector<8x8xf32>
    %73 = arith.truncf %72 : vector<8x8xf32> to vector<8x8xbf16>
    %c0_45 = arith.constant 0 : index
    %c2_46 = arith.constant 2 : index
    %c0_47 = arith.constant 0 : index
    %c0_48 = arith.constant 0 : index
    %74 = vector.load %arg9[%c0_45, %c2_46, %c0_47, %c0_48] : memref<1x4x8x8xbf16, #tpu.memory_space<vmem>>, vector<1x1x8x8xbf16>
    %75 = vector.shape_cast %74 : vector<1x1x8x8xbf16> to vector<8x8xbf16>
    %76 = vector.shape_cast %73 : vector<8x8xbf16> to vector<1x1x8x8xbf16>
    tpu.vector_store %arg9[%c0_45, %c2_46, %c0_47, %c0_48], %76 {strides = array<i32>} : memref<1x4x8x8xbf16, #tpu.memory_space<vmem>>, vector<1x1x8x8xbf16>,
    %77 = vector.extract_strided_slice %31 {offsets = [0, 24], sizes = [8, 8], strides = [1, 1]} : vector<8x96xf32> to vector<8x8xf32>
    %78 = arith.truncf %77 : vector<8x8xf32> to vector<8x8xbf16>
    %c0_49 = arith.constant 0 : index
    %c3 = arith.constant 3 : index
    %c0_50 = arith.constant 0 : index
    %c0_51 = arith.constant 0 : index
    %79 = vector.load %arg7[%c0_49, %c3, %c0_50, %c0_51] : memref<1x4x8x8xbf16, #tpu.memory_space<vmem>>, vector<1x1x8x8xbf16>
    %80 = vector.shape_cast %79 : vector<1x1x8x8xbf16> to vector<8x8xbf16>
    %81 = vector.shape_cast %78 : vector<8x8xbf16> to vector<1x1x8x8xbf16>
    tpu.vector_store %arg7[%c0_49, %c3, %c0_50, %c0_51], %81 {strides = array<i32>} : memref<1x4x8x8xbf16, #tpu.memory_space<vmem>>, vector<1x1x8x8xbf16>,
    %82 = vector.extract_strided_slice %31 {offsets = [0, 56], sizes = [8, 8], strides = [1, 1]} : vector<8x96xf32> to vector<8x8xf32>
    %83 = arith.truncf %82 : vector<8x8xf32> to vector<8x8xbf16>
    %c0_52 = arith.constant 0 : index
    %c3_53 = arith.constant 3 : index
    %c0_54 = arith.constant 0 : index
    %c0_55 = arith.constant 0 : index
    %84 = vector.load %arg8[%c0_52, %c3_53, %c0_54, %c0_55] : memref<1x4x8x8xbf16, #tpu.memory_space<vmem>>, vector<1x1x8x8xbf16>
    %85 = vector.shape_cast %84 : vector<1x1x8x8xbf16> to vector<8x8xbf16>
    %86 = vector.shape_cast %83 : vector<8x8xbf16> to vector<1x1x8x8xbf16>
    tpu.vector_store %arg8[%c0_52, %c3_53, %c0_54, %c0_55], %86 {strides = array<i32>} : memref<1x4x8x8xbf16, #tpu.memory_space<vmem>>, vector<1x1x8x8xbf16>,
    %87 = vector.extract_strided_slice %31 {offsets = [0, 88], sizes = [8, 8], strides = [1, 1]} : vector<8x96xf32> to vector<8x8xf32>
    %88 = arith.truncf %87 : vector<8x8xf32> to vector<8x8xbf16>
    %c0_56 = arith.constant 0 : index
    %c3_57 = arith.constant 3 : index
    %c0_58 = arith.constant 0 : index
    %c0_59 = arith.constant 0 : index
    %89 = vector.load %arg9[%c0_56, %c3_57, %c0_58, %c0_59] : memref<1x4x8x8xbf16, #tpu.memory_space<vmem>>, vector<1x1x8x8xbf16>
    %90 = vector.shape_cast %89 : vector<1x1x8x8xbf16> to vector<8x8xbf16>
    %91 = vector.shape_cast %88 : vector<8x8xbf16> to vector<1x1x8x8xbf16>
    tpu.vector_store %arg9[%c0_56, %c3_57, %c0_58, %c0_59], %91 {strides = array<i32>} : memref<1x4x8x8xbf16, #tpu.memory_space<vmem>>, vector<1x1x8x8xbf16>,
    return
  }
  func.func @transform_0(%arg0: i32, %arg1: i32) -> (i32, i32, i32) {
    %c0_i32 = arith.constant 0 : i32
    %c0_i32_0 = arith.constant 0 : i32
    return %arg0, %arg1, %c0_i32 : i32, i32, i32
  }
  func.func @transform_1(%arg0: i32, %arg1: i32) -> (i32, i32) {
    %c0_i32 = arith.constant 0 : i32
    %c0_i32_0 = arith.constant 0 : i32
    %c0_i32_1 = arith.constant 0 : i32
    return %c0_i32, %c0_i32_0 : i32, i32
  }
  func.func @transform_2(%arg0: i32, %arg1: i32) -> (i32, i32) {
    %c0_i32 = arith.constant 0 : i32
    %c0_i32_0 = arith.constant 0 : i32
    %c0_i32_1 = arith.constant 0 : i32
    return %c0_i32, %c0_i32_0 : i32, i32
  }
  func.func @transform_3(%arg0: i32, %arg1: i32) -> (i32, i32) {
    %c0_i32 = arith.constant 0 : i32
    %c0_i32_0 = arith.constant 0 : i32
    %c0_i32_1 = arith.constant 0 : i32
    return %c0_i32, %c0_i32_0 : i32, i32
  }
  func.func @transform_4(%arg0: i32, %arg1: i32) -> (i32, i32) {
    %c0_i32 = arith.constant 0 : i32
    %c0_i32_0 = arith.constant 0 : i32
    %c0_i32_1 = arith.constant 0 : i32
    return %c0_i32, %c0_i32_0 : i32, i32
  }
  func.func @transform_5(%arg0: i32, %arg1: i32) -> (i32, i32, i32, i32) {
    %c0_i32 = arith.constant 0 : i32
    %c0_i32_0 = arith.constant 0 : i32
    %c0_i32_1 = arith.constant 0 : i32
    return %arg0, %c0_i32, %arg1, %c0_i32_0 : i32, i32, i32, i32
  }
  func.func @transform_6(%arg0: i32, %arg1: i32) -> (i32, i32, i32, i32) {
    %c0_i32 = arith.constant 0 : i32
    %c0_i32_0 = arith.constant 0 : i32
    %c0_i32_1 = arith.constant 0 : i32
    return %arg0, %c0_i32, %arg1, %c0_i32_0 : i32, i32, i32, i32
  }
  func.func @transform_7(%arg0: i32, %arg1: i32) -> (i32, i32, i32, i32) {
    %c0_i32 = arith.constant 0 : i32
    %c0_i32_0 = arith.constant 0 : i32
    %c0_i32_1 = arith.constant 0 : i32
    return %arg0, %c0_i32, %arg1, %c0_i32_0 : i32, i32, i32, i32
  }
}

</mosaic_0001>

<llo_original>
// kernel: tpu_custom_call.1
$region0: #{tpu_custom_call.1}
  #allocation0 [shape = 'u32[]', space=smem, size = 0x4, offset = 0x4, fixed_abs, tag = 'smem constant byte address 0x4 - core index']
  #allocation1 [shape = 'u32[144,128]{1,0:T(1,128)}', space=vmem, size = 0x12000, scoped, tag = 'internal scratch']
  %s0 = inlined_call_operand.hbm [shape: f32[2,8,32], index: 0, kind: input, shape index: {}]
  %s1 = inlined_call_operand.vmem [shape: f32[1,32], index: 1, kind: input, shape index: {}]
  %s2 = inlined_call_operand.vmem [shape: f32[1,32], index: 2, kind: input, shape index: {}]
  %s3 = inlined_call_operand.hbm [shape: bf16[32,96], index: 3, kind: input, shape index: {}]
  %s4 = inlined_call_operand.vmem [shape: f32[1,96], index: 4, kind: input, shape index: {}]
  %s5 = inlined_call_operand.hbm [shape: bf16[2,4,8,8], index: 5, kind: output, shape index: {0}]
  %s6 = inlined_call_operand.hbm [shape: bf16[2,4,8,8], index: 6, kind: output, shape index: {1}]
  %s7 = inlined_call_operand.hbm [shape: bf16[2,4,8,8], index: 7, kind: output, shape index: {2}]
  %8 = xla_tuple %s5, %s6, %s7
  %s9 = sld [smem:[#allocation0]]
  $region77: #{tpu_custom_call.1} parent=0
    _
  %s11 = ssub.s32 1, %s9
  %s12 = scalar_select 0, %s11, %s9
  $region1: #{tpu_custom_call.1} parent=0
    #allocation2 [shape = 'u8[8192]{0}', space=vmem, size = 0x2000, scoped, tag = 'input window, operand 0']
    #allocation3 [shape = 's32[2]{0}', space=sflag, size = 0x8, scoped, tag = 'scoped memory for tpu_custom_call.1']
    #allocation4 [shape = 's32[2]{0}', space=sflag, size = 0x8, scoped, tag = 'scoped memory for tpu_custom_call.1']
    #allocation5 [shape = 'u8[8192]{0}', space=vmem, size = 0x2000, scoped, tag = 'input window, operand 3, single buffered']
    #allocation6 [shape = 's32[1]{0}', space=sflag, size = 0x4, scoped, tag = 'scoped memory for tpu_custom_call.1']
    #allocation7 [shape = 'u8[16384]{0}', space=vmem, size = 0x4000, scoped, tag = 'output window, operand 0']
    #allocation8 [shape = 'u8[16384]{0}', space=vmem, size = 0x4000, scoped, tag = 'output window, operand 1']
    #allocation9 [shape = 's32[2]{0}', space=sflag, size = 0x8, scoped, tag = 'scoped memory for tpu_custom_call.1']
    #allocation10 [shape = 'u8[16384]{0}', space=vmem, size = 0x4000, scoped, tag = 'output window, operand 2']
    %13 = vsyncpa [#allocation3], 0
    %s14 = scalar_lea.sflag [#allocation3], 1
    %15 = vsyncpa %s14, 0
    %16 = vsyncpa [#allocation6], 0
    %17 = vsyncpa [#allocation4], 0
    %s18 = scalar_lea.sflag [#allocation4], 1
    %19 = vsyncpa %s18, 0
    %20 = vsyncpa [#allocation9], 0
    %s21 = scalar_lea.sflag [#allocation9], 1
    %22 = vsyncpa %s21, 0
    loop: start=0, step=1, limit=4
    $region2: #{tpu_custom_call.1} parent=1 // loop_pre_header
      _
    $region3: #{tpu_custom_call.1} parent=1 // loop_header
      %s24 = sphi 0, %s28
      %p25 = scmp.ge.s32.totalorder %s24, 4
      %s31 = sphi 0, %s43
      %s32 = sphi 0, %s39
      %s33 = sphi 0, %s31
      %s34 = sphi 0, %s32
      %s35 = sphi 0, %s33
      %s36 = sphi 0, %s34
      %s48 = sphi 0, %s50
      %s51 = sphi 0, %s48
      %s52 = sphi 0, %s51
      %s68 = sphi 0, %s52
      %s72 = sphi 0, %s72
      %s74 = sphi 0, %s72
      %s75 = sphi 0, %s74
      %s89 = sphi 0, %s75
      %s93 = sphi 0, %s93
      %s95 = sphi 0, %s93
      %s96 = sphi 0, %s95
      %s110 = sphi 0, %s96
      %s114 = sphi 0, %s114
      %s116 = sphi 0, %s114
      %s117 = sphi 0, %s116
      %s131 = sphi 0, %s117
      %s135 = sphi 0, %s135
      %s137 = sphi 0, %s135
      %s138 = sphi 0, %s137
      %s152 = sphi 0, %s138
      %s160 = sphi 0, %s162
      %s163 = sphi 0, %s160
      %s164 = sphi 0, %s163
      %s180 = sphi 0, %s164
      %s188 = sphi 0, %s190
      %s191 = sphi 0, %s188
      %s192 = sphi 0, %s191
      %s208 = sphi 0, %s192
      %s216 = sphi 0, %s218
      %s219 = sphi 0, %s216
      %s220 = sphi 0, %s219
      %s236 = sphi 0, %s220
    $region4: #{tpu_custom_call.1} parent=1 // loop_header_branch
      %27 = sbr.rel (%p25) target = $region8
    $region5: #{tpu_custom_call.1} parent=1 // loop_body
      %s29 = ssub.s32 %s24, 1
      %s30 = ssub.s32 %s24, 2
      %s37 = sadd.s32 1, %s32
      %p38 = scmp.ge.s32.totalorder %s37, 1
      %s39 = scalar_select %p38, 0, %s37
      %s40 = sadd.s32 1, %s31
      %s41 = scalar_select %p38, %s40, %s31
      %p42 = scmp.ge.s32.totalorder %s41, 2
      %s43 = scalar_select %p42, 0, %s41
      %s44 = ssub.s32 %s31, %s43
      %s45 = ssub.s32 %s32, %s39
      %s46 = sor.u32 %s44, %s45
      %p47 = scmp.eq.s32.totalorder %s46, 0
      %s49 = sadd.s32 %s48, 1
      %s50 = scalar_select %p47, %s48, %s49
      %p53 = pneg %p47
      %p54 = scmp.eq.s32.totalorder %s24, 1
      %p55 = por %p53, %p54
      %p56 = scmp.ne.s32.totalorder %s48, %s51
      %p57 = scmp.eq.s32.totalorder %s24, 0
      %p58 = por %p56, %p57
      %p59 = scmp.ne.s32.totalorder %s48, %s51
      %p60 = scmp.eq.s32.totalorder %s29, 1
      %p61 = por %p59, %p60
      %p62 = scmp.ne.s32.totalorder %s51, %s52
      %p63 = scmp.eq.s32.totalorder %s29, 0
      %p64 = por %p62, %p63
      %p65 = scmp.ne.s32.totalorder %s51, %s52
      %p66 = scmp.eq.s32.totalorder %s30, 1
      %p67 = por %p65, %p66
      %p69 = scmp.ne.s32.totalorder %s52, %s68
      %p70 = scmp.eq.s32.totalorder %s30, 0
      %p71 = por %p69, %p70
      %s73 = sadd.s32 %s72, 1
      %p76 = scmp.eq.s32.totalorder %s24, 1
      %p77 = scmp.ne.s32.totalorder %s72, %s74
      %p78 = scmp.eq.s32.totalorder %s24, 0
      %p79 = por %p77, %p78
      %p80 = scmp.ne.s32.totalorder %s72, %s74
      %p81 = scmp.eq.s32.totalorder %s29, 1
      %p82 = por %p80, %p81
      %p83 = scmp.ne.s32.totalorder %s74, %s75
      %p84 = scmp.eq.s32.totalorder %s29, 0
      %p85 = por %p83, %p84
      %p86 = scmp.ne.s32.totalorder %s74, %s75
      %p87 = scmp.eq.s32.totalorder %s30, 1
      %p88 = por %p86, %p87
      %p90 = scmp.ne.s32.totalorder %s75, %s89
      %p91 = scmp.eq.s32.totalorder %s30, 0
      %p92 = por %p90, %p91
      %s94 = sadd.s32 %s93, 1
      %p97 = scmp.eq.s32.totalorder %s24, 1
      %p98 = scmp.ne.s32.totalorder %s93, %s95
      %p99 = scmp.eq.s32.totalorder %s24, 0
      %p100 = por %p98, %p99
      %p101 = scmp.ne.s32.totalorder %s93, %s95
      %p102 = scmp.eq.s32.totalorder %s29, 1
      %p103 = por %p101, %p102
      %p104 = scmp.ne.s32.totalorder %s95, %s96
      %p105 = scmp.eq.s32.totalorder %s29, 0
      %p106 = por %p104, %p105
      %p107 = scmp.ne.s32.totalorder %s95, %s96
      %p108 = scmp.eq.s32.totalorder %s30, 1
      %p109 = por %p107, %p108
      %p111 = scmp.ne.s32.totalorder %s96, %s110
      %p112 = scmp.eq.s32.totalorder %s30, 0
      %p113 = por %p111, %p112
      %s115 = sadd.s32 %s114, 1
      %p118 = scmp.eq.s32.totalorder %s24, 1
      %p119 = scmp.ne.s32.totalorder %s114, %s116
      %p120 = scmp.eq.s32.totalorder %s24, 0
      %p121 = por %p119, %p120
      %p122 = scmp.ne.s32.totalorder %s114, %s116
      %p123 = scmp.eq.s32.totalorder %s29, 1
      %p124 = por %p122, %p123
      %p125 = scmp.ne.s32.totalorder %s116, %s117
      %p126 = scmp.eq.s32.totalorder %s29, 0
      %p127 = por %p125, %p126
      %p128 = scmp.ne.s32.totalorder %s116, %s117
      %p129 = scmp.eq.s32.totalorder %s30, 1
      %p130 = por %p128, %p129
      %p132 = scmp.ne.s32.totalorder %s117, %s131
      %p133 = scmp.eq.s32.totalorder %s30, 0
      %p134 = por %p132, %p133
      %s136 = sadd.s32 %s135, 1
      %p139 = scmp.eq.s32.totalorder %s24, 1
      %p140 = scmp.ne.s32.totalorder %s135, %s137
      %p141 = scmp.eq.s32.totalorder %s24, 0
      %p142 = por %p140, %p141
      %p143 = scmp.ne.s32.totalorder %s135, %s137
      %p144 = scmp.eq.s32.totalorder %s29, 1
      %p145 = por %p143, %p144
      %p146 = scmp.ne.s32.totalorder %s137, %s138
      %p147 = scmp.eq.s32.totalorder %s29, 0
      %p148 = por %p146, %p147
      %p149 = scmp.ne.s32.totalorder %s137, %s138
      %p150 = scmp.eq.s32.totalorder %s30, 1
      %p151 = por %p149, %p150
      %p153 = scmp.ne.s32.totalorder %s138, %s152
      %p154 = scmp.eq.s32.totalorder %s30, 0
      %p155 = por %p153, %p154
      %s156 = ssub.s32 %s31, %s43
      %s157 = ssub.s32 %s32, %s39
      %s158 = sor.u32 %s156, %s157
      %p159 = scmp.eq.s32.totalorder %s158, 0
      %s161 = sadd.s32 %s160, 1
      %s162 = scalar_select %p159, %s160, %s161
      %p165 = pneg %p159
      %p166 = scmp.eq.s32.totalorder %s24, 1
      %p167 = por %p165, %p166
      %p168 = scmp.ne.s32.totalorder %s160, %s163
      %p169 = scmp.eq.s32.totalorder %s24, 0
      %p170 = por %p168, %p169
      %p171 = scmp.ne.s32.totalorder %s160, %s163
      %p172 = scmp.eq.s32.totalorder %s29, 1
      %p173 = por %p171, %p172
      %p174 = scmp.ne.s32.totalorder %s163, %s164
      %p175 = scmp.eq.s32.totalorder %s29, 0
      %p176 = por %p174, %p175
      %p177 = scmp.ne.s32.totalorder %s163, %s164
      %p178 = scmp.eq.s32.totalorder %s30, 1
      %p179 = por %p177, %p178
      %p181 = scmp.ne.s32.totalorder %s164, %s180
      %p182 = scmp.eq.s32.totalorder %s30, 0
      %p183 = por %p181, %p182
      %s184 = ssub.s32 %s31, %s43
      %s185 = ssub.s32 %s32, %s39
      %s186 = sor.u32 %s184, %s185
      %p187 = scmp.eq.s32.totalorder %s186, 0
      %s189 = sadd.s32 %s188, 1
      %s190 = scalar_select %p187, %s188, %s189
      %p193 = pneg %p187
      %p194 = scmp.eq.s32.totalorder %s24, 1
      %p195 = por %p193, %p194
      %p196 = scmp.ne.s32.totalorder %s188, %s191
      %p197 = scmp.eq.s32.totalorder %s24, 0
      %p198 = por %p196, %p197
      %p199 = scmp.ne.s32.totalorder %s188, %s191
      %p200 = scmp.eq.s32.totalorder %s29, 1
      %p201 = por %p199, %p200
      %p202 = scmp.ne.s32.totalorder %s191, %s192
      %p203 = scmp.eq.s32.totalorder %s29, 0
      %p204 = por %p202, %p203
      %p205 = scmp.ne.s32.totalorder %s191, %s192
      %p206 = scmp.eq.s32.totalorder %s30, 1
      %p207 = por %p205, %p206
      %p209 = scmp.ne.s32.totalorder %s192, %s208
      %p210 = scmp.eq.s32.totalorder %s30, 0
      %p211 = por %p209, %p210
      %s212 = ssub.s32 %s31, %s43
      %s213 = ssub.s32 %s32, %s39
      %s214 = sor.u32 %s212, %s213
      %p215 = scmp.eq.s32.totalorder %s214, 0
      %s217 = sadd.s32 %s216, 1
      %s218 = scalar_select %p215, %s216, %s217
      %p221 = pneg %p215
      %p222 = scmp.eq.s32.totalorder %s24, 1
      %p223 = por %p221, %p222
      %p224 = scmp.ne.s32.totalorder %s216, %s219
      %p225 = scmp.eq.s32.totalorder %s24, 0
      %p226 = por %p224, %p225
      %p227 = scmp.ne.s32.totalorder %s216, %s219
      %p228 = scmp.eq.s32.totalorder %s29, 1
      %p229 = por %p227, %p228
      %p230 = scmp.ne.s32.totalorder %s219, %s220
      %p231 = scmp.eq.s32.totalorder %s29, 0
      %p232 = por %p230, %p231
      %p233 = scmp.ne.s32.totalorder %s219, %s220
      %p234 = scmp.eq.s32.totalorder %s30, 1
      %p235 = por %p233, %p234
      %p237 = scmp.ne.s32.totalorder %s220, %s236
      %p238 = scmp.eq.s32.totalorder %s30, 0
      %p239 = por %p237, %p238
      %p240 = scmp.le.s32.totalorder 1, %s24
      %p241 = scmp.lt.s32.totalorder %s24, 3
      %p242 = pnand %p240, %p241
      %p243 = pneg %p242
      // Predicated region
      $region9: #{tpu_custom_call.1} parent=5 // pred_check
        _
      $region10: #{tpu_custom_call.1} parent=5 // pred_check_branch
        %245 = sbr.rel (%p242) target = $region12
      $region11: #{tpu_custom_call.1} parent=5 // pred_region
        %s246 = ssub.s32 %s24, 1
        // Predicated region
        $region13: #{tpu_custom_call.1} parent=11 // pred_check
          %p247 = pneg %p85
        $region14: #{tpu_custom_call.1} parent=11 // pred_check_branch
          %249 = sbr.rel (%p247) target = $region16
        $region15: #{tpu_custom_call.1} parent=11 // pred_region
          _
        $region16: #{tpu_custom_call.1} parent=11 // pred_fallthru
          _
        // Predicated region
        $region17: #{tpu_custom_call.1} parent=11 // pred_check
          %p250 = pneg %p106
        $region18: #{tpu_custom_call.1} parent=11 // pred_check_branch
          %252 = sbr.rel (%p250) target = $region20
        $region19: #{tpu_custom_call.1} parent=11 // pred_region
          _
        $region20: #{tpu_custom_call.1} parent=11 // pred_fallthru
          _
        // Predicated region
        $region21: #{tpu_custom_call.1} parent=11 // pred_check
          %p253 = pneg %p127
        $region22: #{tpu_custom_call.1} parent=11 // pred_check_branch
          %255 = sbr.rel (%p253) target = $region24
        $region23: #{tpu_custom_call.1} parent=11 // pred_region
          %s257 = ssub.s32 256, 256
          %258 = vsyncadd [#allocation6], %s257
          %s259 = sshll.u32 [#allocation5], 4
          %s260 = int_to_ptr.vmem [resolvable:$true] %s259
          %265 = dma.hbm_to_vmem [thread:$0]  %s3, 256, %s260, [#allocation6], 64, 64, 4
        $region24: #{tpu_custom_call.1} parent=11 // pred_fallthru
          _
        // Predicated region
        $region25: #{tpu_custom_call.1} parent=11 // pred_check
          %p266 = pneg %p148
        $region26: #{tpu_custom_call.1} parent=11 // pred_check_branch
          %268 = sbr.rel (%p266) target = $region28
        $region27: #{tpu_custom_call.1} parent=11 // pred_region
          _
        $region28: #{tpu_custom_call.1} parent=11 // pred_fallthru
          _
      $region12: #{tpu_custom_call.1} parent=5 // pred_fallthru
        _
      %p269 = scmp.lt.s32.totalorder %s24, 2
      // Predicated region
      $region29: #{tpu_custom_call.1} parent=5 // pred_check
        %p270 = pneg %p269
      $region30: #{tpu_custom_call.1} parent=5 // pred_check_branch
        %272 = sbr.rel (%p270) target = $region32
      $region31: #{tpu_custom_call.1} parent=5 // pred_region
        // Predicated region
        $region33: #{tpu_custom_call.1} parent=31 // pred_check
          %p273 = pneg %p58
        $region34: #{tpu_custom_call.1} parent=31 // pred_check_branch
          %275 = sbr.rel (%p273) target = $region36
        $region35: #{tpu_custom_call.1} parent=31 // pred_region
          %s276 = sand.u32 %s48, 1
          %s277 = scalar_lea.sflag [#allocation3], %s276
          %s278 = sand.u32 %s48, 1
          %s279 = smul.addr %s278, 8
          %s280 = scalar_lea.vmem [#allocation2], %s279
          %s282 = ssub.s32 128, 128
          %283 = vsyncadd %s277, %s282
          %s284 = sadd.s32 %s32, %s31
          %s285 = smul.addr %s284, 128
          %s286 = scalar_lea.hbm %s0, %s285
          %s288 = sshll.u32 %s280, 4
          %s289 = int_to_ptr.vmem [resolvable:$true] %s288
          %291 = dma.hbm_to_vmem [thread:$0]  %s286, 128, %s289, %s277
        $region36: #{tpu_custom_call.1} parent=31 // pred_fallthru
          _
      $region32: #{tpu_custom_call.1} parent=5 // pred_fallthru
        _
      %p292 = scmp.le.s32.totalorder 1, %s24
      %p293 = scmp.lt.s32.totalorder %s24, 3
      %p294 = pnand %p292, %p293
      %p295 = pneg %p294
      // Predicated region
      $region37: #{tpu_custom_call.1} parent=5 // pred_check
        _
      $region38: #{tpu_custom_call.1} parent=5 // pred_check_branch
        %297 = sbr.rel (%p294) target = $region40
      $region39: #{tpu_custom_call.1} parent=5 // pred_region
        %s298 = ssub.s32 %s24, 1
        %s299 = sand.u32 %s51, 1
        %s300 = scalar_lea.sflag [#allocation3], %s299
        %s301 = sand.u32 %s51, 1
        %s302 = smul.addr %s301, 8
        %s303 = scalar_lea.vmem [#allocation2], %s302
        // Predicated region
        $region41: #{tpu_custom_call.1} parent=39 // pred_check
          %p304 = pneg %p64
        $region42: #{tpu_custom_call.1} parent=39 // pred_check_branch
          %306 = sbr.rel (%p304) target = $region44
        $region43: #{tpu_custom_call.1} parent=39 // pred_region
          %307 = dma.done %s300, 128
        $region44: #{tpu_custom_call.1} parent=39 // pred_fallthru
          _
        // Predicated region
        $region45: #{tpu_custom_call.1} parent=39 // pred_check
          %p308 = pneg %p127
        $region46: #{tpu_custom_call.1} parent=39 // pred_check_branch
          %310 = sbr.rel (%p308) target = $region48
        $region47: #{tpu_custom_call.1} parent=39 // pred_region
          %311 = dma.done [#allocation6], 256
        $region48: #{tpu_custom_call.1} parent=39 // pred_fallthru
          _
        %s312 = sand.u32 %s51, 1
        %s313 = scalar_lea.sflag [#allocation3], %s312
        %s314 = sand.u32 %s51, 1
        %s315 = smul.addr %s314, 8
        %s316 = scalar_lea.vmem [#allocation2], %s315
        %p317 = pneg %p64
        %p318 = pneg %p61
        %p319 = pneg %p85
        %p320 = pneg %p82
        %p321 = pneg %p106
        %p322 = pneg %p103
        %p323 = pneg %p127
        %p324 = pneg %p124
        %p325 = pneg %p148
        %p326 = pneg %p145
        %p327 = pneg %p176
        %p328 = pneg %p173
        %s329 = sand.u32 %s163, 1
        %s330 = scalar_lea.sflag [#allocation4], %s329
        %s331 = sand.u32 %s163, 1
        %s332 = smul.addr %s331, 16
        %s333 = scalar_lea.vmem [#allocation7], %s332
        %p334 = pneg %p204
        %p335 = pneg %p201
        %s336 = sand.u32 %s29, 1
        %s337 = scalar_lea.sflag [#allocation9], %s336
        %s338 = sand.u32 %s191, 1
        %s339 = smul.addr %s338, 16
        %s340 = scalar_lea.vmem [#allocation8], %s339
        %p341 = pneg %p232
        %p342 = pneg %p229
        %s343 = sand.u32 %s29, 1
        %s344 = scalar_lea.sflag [#allocation9], %s343
        %s345 = sand.u32 %s219, 1
        %s346 = smul.addr %s345, 16
        %s347 = scalar_lea.vmem [#allocation10], %s346
        %v349 = vld [vmem:[%s303] sm:$0xff]
        %v350 = vld [vmem:[%s1] sm:$0x1]
        %v351 = vld [vmem:[%s2] sm:$0x1]
        %vm352 = vcmask 261120
        %v353 = vsel %vm352, %v349, 0.0
        %354 = vadd.xlane.f32.xlu0 %v353
        %v355 = vpop.xlane.xlu0 %354
        %v356 = vrcp.pop 32.0
        %v357 = vmul.f32 %v355, %v356
        %v358 = vsub.f32 %v349, %v357
        %v359 = vmul.f32 %v358, %v358
        %v360 = vsel %vm352, %v359, 0.0
        %361 = vadd.xlane.f32.xlu0 %v360
        %v362 = vpop.xlane.xlu0 %361
        %v363 = vmul.f32 %v362, %v356
        %v364 = vadd.f32 %v363, 1e-05
        %v365 = vrsqrt.pop %v364
        %v366 = vmul.f32 %v358, %v365
        %v368 = vlaneseq
        %v369 = vshrl.u32 %v368, 7
        %v370 = vsub.s32 0, %v369
        %v371 = vrot.slane %v350, %v370
        %v373 = vmul.f32 %v366, %v371
        %v375 = vlaneseq
        %v376 = vshrl.u32 %v375, 7
        %v377 = vsub.s32 0, %v376
        %v378 = vrot.slane %v351, %v377
        %v380 = vadd.f32 %v373, %v378
        %v381 = vpack.c.bf16 %v380, %v380
        %v382 = vld [vmem:[#allocation5] sm:$0xf]
        %v383 = vld [vmem:[#allocation5 + $0x4] sm:$0xf]
        %v384 = vld [vmem:[#allocation5 + $0x8] sm:$0xf]
        %v385 = vld [vmem:[#allocation5 + $0xc] sm:$0xf]
        %v386 = vld [vmem:[%s4] sm:$0x1]
        %v388 = vlaneseq
        %v389 = vshrl.u32 %v388, 7
        %v390 = vsub.s32 0, %v389
        %v391 = vrot.slane %v386, %v390
        %v397 = vunpack.c.l.b16 %v382
        %v398 = vunpack.c.l.b16 %v383
        %v399 = vunpack.c.l.b16 %v384
        %v400 = vunpack.c.l.b16 %v385
        %v401 = vpack.c.b16 %v398, %v397
        %v402 = vpack.c.b16 %v400, %v399
        %v406 = vsel %vm352, %v381, 0
        %408 = vmatprep.subr.bf16.mxu0 0
        %409 = vmatpush1.bf16.msra.mxu0 0
        %410 = vmatprep.subr.bf16.mxu0 0
        %411 = vmatpush1.bf16.msra.mxu0 0
        %412 = vmatprep.subr.bf16.mxu0 0
        %413 = vmatpush1.bf16.msra.mxu0 0
        %414 = vmatprep.subr.bf16.mxu0 0
        %415 = vmatpush1.bf16.msra.mxu0 0
        %416 = vmatprep.subr.bf16.mxu0 0
        %417 = vmatpush1.bf16.msra.mxu0 0
        %418 = vmatprep.subr.bf16.mxu0 0
        %419 = vmatpush1.bf16.msra.mxu0 0
        %420 = vmatprep.subr.bf16.mxu0 0
        %421 = vmatpush1.bf16.msra.mxu0 %v402
        %422 = vmatprep.subr.bf16.mxu0 0
        %423 = vmatpush1.bf16.msra.mxu0 %v401
        %424 = vmatprep.subr.bf16.mxu0 0
        %425 = vmatpush2.bf16.msra.mxu0 0
        %426 = vmatprep.subr.bf16.mxu0 0
        %427 = vmatpush2.bf16.msra.mxu0 0
        %428 = vmatprep.subr.bf16.mxu0 0
        %429 = vmatpush2.bf16.msra.mxu0 0
        %430 = vmatprep.subr.bf16.mxu0 0
        %431 = vmatpush2.bf16.msra.mxu0 0
        %432 = vmatprep.subr.bf16.mxu0 0
        %433 = vmatpush2.bf16.msra.mxu0 0
        %434 = vmatprep.subr.bf16.mxu0 0
        %435 = vmatpush2.bf16.msra.mxu0 0
        %436 = vmatprep.subr.bf16.mxu0 0
        %437 = vmatpush2.bf16.msra.mxu0 0
        %438 = vmatprep.subr.bf16.mxu0 0
        %439 = vmatpush2.bf16.msra.mxu0 0
        %440 = vmatprep.mubr.bf16.mxu0 0
        %441 = vmatmul.mubr.bf16.gmra.mxu0 %v406
        %v442 = vpop.f32.mrf.mxu0
        %v443 = vadd.f32 %v391, %v442
        %v444 = vpop.f32.mrf.mxu0
        %v445 = vpop.f32.mrf.mxu0
        %v446 = vpop.f32.mrf.mxu0
        %447 = vdwg.mxu0
        %v448 = vpack.c.bf16 %v443, %v443
        %vm449 = vcmask 60416
        %450 = vst.msk [vmem:[%s333] sm:$0xf] %vm449, %v448
        %v452 = vunpack.c.l.b16 %v448
        %v453 = vpack.c.b16 %v452, %v452
        %454 = vrot.lane.b32.xlu0 %v453, 96
        %v455 = vpop.permute.xlu0 %454
        %457 = vst.msk [vmem:[%s340] sm:$0xf] %vm449, %v455
        %458 = vrot.lane.b32.xlu0 %v453, 64
        %v459 = vpop.permute.xlu0 %458
        %461 = vst.msk [vmem:[%s347] sm:$0xf] %vm449, %v459
        %462 = vrot.lane.b32.xlu0 %v453, 120
        %v463 = vpop.permute.xlu0 %462
        %s465 = scalar_lea.vmem %s333, 4 [#allocation7]
        %466 = vst.msk [vmem:[%s465] sm:$0xf] %vm449, %v463
        %467 = vrot.lane.b32.xlu0 %v453, 88
        %v468 = vpop.permute.xlu0 %467
        %s470 = scalar_lea.vmem %s340, 4 [#allocation8]
        %471 = vst.msk [vmem:[%s470] sm:$0xf] %vm449, %v468
        %472 = vrot.lane.b32.xlu0 %v453, 56
        %v473 = vpop.permute.xlu0 %472
        %s475 = scalar_lea.vmem %s347, 4 [#allocation10]
        %476 = vst.msk [vmem:[%s475] sm:$0xf] %vm449, %v473
        %477 = vrot.lane.b32.xlu0 %v453, 112
        %v478 = vpop.permute.xlu0 %477
        %s480 = scalar_lea.vmem %s333, 8 [#allocation7]
        %481 = vst.msk [vmem:[%s480] sm:$0xf] %vm449, %v478
        %482 = vrot.lane.b32.xlu0 %v453, 80
        %v483 = vpop.permute.xlu0 %482
        %s485 = scalar_lea.vmem %s340, 8 [#allocation8]
        %486 = vst.msk [vmem:[%s485] sm:$0xf] %vm449, %v483
        %487 = vrot.lane.b32.xlu0 %v453, 48
        %v488 = vpop.permute.xlu0 %487
        %s490 = scalar_lea.vmem %s347, 8 [#allocation10]
        %491 = vst.msk [vmem:[%s490] sm:$0xf] %vm449, %v488
        %492 = vrot.lane.b32.xlu0 %v453, 104
        %v493 = vpop.permute.xlu0 %492
        %s495 = scalar_lea.vmem %s333, 12 [#allocation7]
        %496 = vst.msk [vmem:[%s495] sm:$0xf] %vm449, %v493
        %497 = vrot.lane.b32.xlu0 %v453, 72
        %v498 = vpop.permute.xlu0 %497
        %s500 = scalar_lea.vmem %s340, 12 [#allocation8]
        %501 = vst.msk [vmem:[%s500] sm:$0xf] %vm449, %v498
        %502 = vrot.lane.b32.xlu0 %v453, 40
        %v503 = vpop.permute.xlu0 %502
        %s505 = scalar_lea.vmem %s347, 12 [#allocation10]
        %506 = vst.msk [vmem:[%s505] sm:$0xf] %vm449, %v503
        %s507 = sand.u32 %s163, 1
        %s508 = scalar_lea.sflag [#allocation4], %s507
        %s509 = sand.u32 %s163, 1
        %s510 = smul.addr %s509, 16
        %s511 = scalar_lea.vmem [#allocation7], %s510
        %s512 = sand.u32 %s29, 1
        %s513 = scalar_lea.sflag [#allocation9], %s512
        %s514 = sand.u32 %s191, 1
        %s515 = smul.addr %s514, 16
        %s516 = scalar_lea.vmem [#allocation8], %s515
        %s517 = sand.u32 %s29, 1
        %s518 = scalar_lea.sflag [#allocation9], %s517
        %s519 = sand.u32 %s219, 1
        %s520 = smul.addr %s519, 16
        %s521 = scalar_lea.vmem [#allocation10], %s520
        // Predicated region
        $region49: #{tpu_custom_call.1} parent=39 // pred_check
          %p522 = pneg %p173
        $region50: #{tpu_custom_call.1} parent=39 // pred_check_branch
          %524 = sbr.rel (%p522) target = $region52
        $region51: #{tpu_custom_call.1} parent=39 // pred_region
          %s526 = ssub.s32 256, 256
          %527 = vsyncadd %s508, %s526
          %s528 = smul.addr %s33, 4
          %s529 = sadd.s32 %s34, %s528
          %s530 = smul.addr %s529, 64
          %s531 = scalar_lea.hbm %s5, %s530
          %s532 = sshll.u32 %s511, 4
          %s533 = int_to_ptr.vmem [resolvable:$true] %s532
          %538 = dma.vmem_to_hbm [thread:$0]  %s533, 256, %s531, %s508, 64, 64, 4
        $region52: #{tpu_custom_call.1} parent=39 // pred_fallthru
          _
        // Predicated region
        $region53: #{tpu_custom_call.1} parent=39 // pred_check
          %p539 = pneg %p201
        $region54: #{tpu_custom_call.1} parent=39 // pred_check_branch
          %541 = sbr.rel (%p539) target = $region56
        $region55: #{tpu_custom_call.1} parent=39 // pred_region
          %s543 = ssub.s32 256, 256
          %544 = vsyncadd %s513, %s543
          %s545 = smul.addr %s33, 4
          %s546 = sadd.s32 %s34, %s545
          %s547 = smul.addr %s546, 64
          %s548 = scalar_lea.hbm %s6, %s547
          %s549 = sshll.u32 %s516, 4
          %s550 = int_to_ptr.vmem [resolvable:$true] %s549
          %555 = dma.vmem_to_hbm [thread:$0]  %s550, 256, %s548, %s513, 64, 64, 4
        $region56: #{tpu_custom_call.1} parent=39 // pred_fallthru
          _
        // Predicated region
        $region57: #{tpu_custom_call.1} parent=39 // pred_check
          %p556 = pneg %p229
        $region58: #{tpu_custom_call.1} parent=39 // pred_check_branch
          %558 = sbr.rel (%p556) target = $region60
        $region59: #{tpu_custom_call.1} parent=39 // pred_region
          %s560 = ssub.s32 256, 256
          %561 = vsyncadd %s518, %s560
          %s562 = smul.addr %s33, 4
          %s563 = sadd.s32 %s34, %s562
          %s564 = smul.addr %s563, 64
          %s565 = scalar_lea.hbm %s7, %s564
          %s566 = sshll.u32 %s521, 4
          %s567 = int_to_ptr.vmem [resolvable:$true] %s566
          %572 = dma.vmem_to_hbm [thread:$0]  %s567, 256, %s565, %s518, 64, 64, 4
        $region60: #{tpu_custom_call.1} parent=39 // pred_fallthru
          _
      $region40: #{tpu_custom_call.1} parent=5 // pred_fallthru
        _
      %p573 = scmp.le.s32.totalorder 2, %s24
      // Predicated region
      $region61: #{tpu_custom_call.1} parent=5 // pred_check
        %p574 = pneg %p573
      $region62: #{tpu_custom_call.1} parent=5 // pred_check_branch
        %576 = sbr.rel (%p574) target = $region64
      $region63: #{tpu_custom_call.1} parent=5 // pred_region
        %s577 = ssub.s32 %s24, 2
        // Predicated region
        $region65: #{tpu_custom_call.1} parent=63 // pred_check
          %p578 = pneg %p179
        $region66: #{tpu_custom_call.1} parent=63 // pred_check_branch
          %580 = sbr.rel (%p578) target = $region68
        $region67: #{tpu_custom_call.1} parent=63 // pred_region
          %s581 = sand.u32 %s164, 1
          %s582 = scalar_lea.sflag [#allocation4], %s581
          %s583 = sand.u32 %s164, 1
          %s584 = smul.addr %s583, 16
          %s585 = scalar_lea.vmem [#allocation7], %s584
          %586 = dma.done %s582, 256
        $region68: #{tpu_custom_call.1} parent=63 // pred_fallthru
          _
        // Predicated region
        $region69: #{tpu_custom_call.1} parent=63 // pred_check
          %p587 = pneg %p207
        $region70: #{tpu_custom_call.1} parent=63 // pred_check_branch
          %589 = sbr.rel (%p587) target = $region72
        $region71: #{tpu_custom_call.1} parent=63 // pred_region
          %s590 = sand.u32 %s30, 1
          %s591 = scalar_lea.sflag [#allocation9], %s590
          %s592 = sand.u32 %s192, 1
          %s593 = smul.addr %s592, 16
          %s594 = scalar_lea.vmem [#allocation8], %s593
          %595 = dma.done %s591, 256
        $region72: #{tpu_custom_call.1} parent=63 // pred_fallthru
          _
        // Predicated region
        $region73: #{tpu_custom_call.1} parent=63 // pred_check
          %p596 = pneg %p235
        $region74: #{tpu_custom_call.1} parent=63 // pred_check_branch
          %598 = sbr.rel (%p596) target = $region76
        $region75: #{tpu_custom_call.1} parent=63 // pred_region
          %s599 = sand.u32 %s30, 1
          %s600 = scalar_lea.sflag [#allocation9], %s599
          %s601 = sand.u32 %s220, 1
          %s602 = smul.addr %s601, 16
          %s603 = scalar_lea.vmem [#allocation10], %s602
          %604 = dma.done %s600, 256
        $region76: #{tpu_custom_call.1} parent=63 // pred_fallthru
          _
      $region64: #{tpu_custom_call.1} parent=5 // pred_fallthru
        _
    $region6: #{tpu_custom_call.1} parent=1 // loop_footer
      %s28 = sadd.s32 1, %s24
    $region7: #{tpu_custom_call.1} parent=1 // loop_footer_branch
      %23 = sbr.rel target = $region3
    $region8: #{tpu_custom_call.1} parent=1 // loop_exit
      _
    %605 = vsyncpa [#allocation3], 1
    %s606 = scalar_lea.sflag [#allocation3], 1
    %607 = vsyncpa %s606, 1
    %608 = vsyncpa [#allocation6], 1
    %609 = vsyncpa [#allocation4], 1
    %s610 = scalar_lea.sflag [#allocation4], 1
    %611 = vsyncpa %s610, 1
    %612 = vsyncpa [#allocation9], 1
    %s613 = scalar_lea.sflag [#allocation9], 1
    %614 = vsyncpa %s613, 1

</llo_original>
